<compile_context>
chip_gen: v6e
topology: v6e:2x2x1
jax: 0.10.0
libtpu: 0.0.40
codegen_flags: <defaults>
</compile_context>

<pallas_src>
import functools

import jax
import jax.numpy as jnp
from jax.experimental import pallas as pl
from jax.experimental.pallas import tpu as pltpu


def _layernorm(h, gamma, beta, eps=1e-5):
    # Two-pass (x - mu)^2 variance: matches torch.nn.LayerNorm, no cancellation.
    mean = jnp.mean(h, axis=-1, keepdims=True)
    c = h - mean
    var = jnp.mean(c * c, axis=-1, keepdims=True)
    return c * jax.lax.rsqrt(var + eps) * gamma + beta


def _leaky_relu(h, slope=0.01):
    return jnp.where(h >= 0, h, slope * h)


def mlp_forecaster_kernel(xt_ref, w1_ref, w2_ref, ln1_ref, ln2_ref, o_ref,
                          *, compute_dtype=jnp.float32):
    """One batch block: 2x(Linear -> LayerNorm -> LeakyReLU), lane-dense I/O."""
    xt = xt_ref[...]                                     # (Bb, IN_pad), lane-contiguous

    # Per-layer vector params, rows = [bias, gamma, beta].
    b1, g1, be1 = ln1_ref[0:1, :], ln1_ref[1:2, :], ln1_ref[2:3, :]
    b2, g2, be2 = ln2_ref[0:1, :], ln2_ref[1:2, :], ln2_ref[2:3, :]

    # --- Layer 1: Linear(IN_pad, H) + LayerNorm + LeakyReLU (f32 accumulate) ---
    h = jnp.dot(xt.astype(compute_dtype), w1_ref[...].astype(compute_dtype),
                preferred_element_type=jnp.float32) + b1
    h = _leaky_relu(_layernorm(h, g1, be1))

    # --- Layer 2: Linear(H, O) + LayerNorm + LeakyReLU ---
    y = jnp.dot(h.astype(compute_dtype), w2_ref[...].astype(compute_dtype),
                preferred_element_type=jnp.float32) + b2
    y = _leaky_relu(_layernorm(y, g2, be2))              # (Bb, F*D)

    # Single lane-dense 2-D store; view/permute to (F, B, D) happens in the wrapper.
    o_ref[...] = y.astype(o_ref.dtype)


def mlp_forecaster_forward(x, t_obs, params, forecast_steps, *,
                           block_b=None, matmul_dtype=jnp.float32):
    """JAX wrapper reproducing MLPForecaster.forward."""
    S, B, D = x.shape
    IN = S * (D + 1)
    w1, w2, ln1, ln2 = params["w1"], params["w2"], params["ln1"], params["ln2"]
    IN_pad, H = w1.shape
    O = w2.shape[1]
    assert IN_pad >= IN and IN_pad % 128 == 0
    assert O == forecast_steps * D

    # --- wrapper-side layout plumbing (cheap XLA ops, keeps the kernel lane-dense) ---
    # torch.cat + permute([1,0,2]) + flatten(1), then zero-pad K to the 128 boundary.
    xt = jnp.concatenate([x, t_obs], axis=-1)            # (S, B, D+1)
    xt = jnp.transpose(xt, (1, 0, 2)).reshape(B, IN)     # (B, IN)
    if IN_pad > IN:
        xt = jnp.pad(xt, ((0, 0), (0, IN_pad - IN)))     # (B, IN_pad) -- exact (zero rows in w1)

    # Batch-block heuristic: biggest blocks that amortise per-step overhead, but
    # >=2 blocks when B permits so a v7x "parallel" axis spans both TensorCores.
    if block_b is None:
        if B <= 256:
            block_b = B                                   # single block; tiny problem
        elif B <= 2048:
            block_b = max(256, ((pl.cdiv(B, 2) + 255) // 256) * 256)
        else:
            block_b = 1024
    nb = pl.cdiv(B, block_b)

    kernel = functools.partial(mlp_forecaster_kernel, compute_dtype=matmul_dtype)

    itemsize = jnp.dtype(jnp.float32).itemsize
    cost = pl.CostEstimate(
        flops=2 * B * (IN_pad * H + H * O),
        transcendentals=2 * B,                            # one rsqrt per row per layer
        bytes_accessed=itemsize * (xt.size + w1.size + w2.size
                                   + ln1.size + ln2.size + B * O),
    )

    y = pl.pallas_call(
        kernel,
        out_shape=jax.ShapeDtypeStruct((B, O), x.dtype),
        grid_spec=pltpu.PrefetchScalarGridSpec(
            num_scalar_prefetch=0,
            grid=(nb,),
            in_specs=[
                pl.BlockSpec((block_b, IN_pad), lambda i: (i, 0)),
                # Weights/params: constant index_maps -> VMEM-resident across grid steps.
                pl.BlockSpec((IN_pad, H), lambda i: (0, 0)),
                pl.BlockSpec((H, O), lambda i: (0, 0)),
                pl.BlockSpec((3, H), lambda i: (0, 0)),
                pl.BlockSpec((3, O), lambda i: (0, 0)),
            ],
            out_specs=pl.BlockSpec((block_b, O), lambda i: (i, 0)),
        ),
        compiler_params=pltpu.CompilerParams(
            dimension_semantics=("parallel",)),           # batch blocks across TCs (v7x)
        cost_estimate=cost,
    )(xt, w1, w2, ln1, ln2)

    # view(B, F, D) + permute([1,0,2]) -> (F, B, D), wrapper-side layout plumbing.
    return jnp.transpose(y.reshape(B, forecast_steps, D), (1, 0, 2))


def init_params(key, input_dim, hidden_dim, output_dim, *, k_pad=128):
    """Deterministic synthetic parameter init (not a checkpoint load).

    w1 is stored K-padded to a multiple of 128 rows (extra rows are zero), so the
    padded xt @ w1 product is numerically identical to the unpadded one.
    """
    in_pad = ((input_dim + k_pad - 1) // k_pad) * k_pad
    k1, k2, k3, k4 = jax.random.split(key, 4)
    w1 = jax.random.normal(k1, (input_dim, hidden_dim), jnp.float32) * 0.05
    w1 = jnp.pad(w1, ((0, in_pad - input_dim), (0, 0)))
    b1 = jax.random.normal(k2, (hidden_dim,), jnp.float32) * 0.01
    w2 = jax.random.normal(k3, (hidden_dim, output_dim), jnp.float32) * 0.05
    b2 = jax.random.normal(k4, (output_dim,), jnp.float32) * 0.01
    # Per-layer packed vector params, rows = [bias, gamma, beta].
    ln1 = jnp.stack([b1,
                     jnp.ones((hidden_dim,), jnp.float32),
                     jnp.zeros((hidden_dim,), jnp.float32)], axis=0)
    ln2 = jnp.stack([b2,
                     jnp.ones((output_dim,), jnp.float32),
                     jnp.zeros((output_dim,), jnp.float32)], axis=0)
    return {"w1": w1, "w2": w2, "ln1": ln1, "ln2": ln2}


def _reference_forward(x, t_obs, params, forecast_steps):
    """Pure-JAX reference mirroring the torch module (for a sanity check)."""
    S, B, D = x.shape
    IN = S * (D + 1)
    w1, w2, ln1, ln2 = params["w1"], params["w2"], params["ln1"], params["ln2"]
    xt = jnp.concatenate([x, t_obs], axis=-1)
    xt = jnp.transpose(xt, (1, 0, 2)).reshape(B, -1)

    def lnorm(h, g, b, eps=1e-5):
        mu = jnp.mean(h, axis=-1, keepdims=True)
        var = jnp.mean((h - mu) ** 2, axis=-1, keepdims=True)
        return (h - mu) * jax.lax.rsqrt(var + eps) * g + b

    def lrelu(h):
        return jnp.where(h >= 0, h, 0.01 * h)

    h = xt @ w1[:IN] + ln1[0]
    h = lrelu(lnorm(h, ln1[1], ln1[2]))
    y = h @ w2 + ln2[0]
    y = lrelu(lnorm(y, ln2[1], ln2[2]))
    return jnp.transpose(y.reshape(B, forecast_steps, D), (1, 0, 2))


if __name__ == "__main__":
    # Small shapes consistent with the module's forward:
    observable_steps = 8     # S
    observable_dim = 4       # D
    hidden_dim = 32          # H
    forecast_steps = 4       # F
    batch = 2                # B

    input_dim = observable_steps * (observable_dim + 1)   # 40
    output_dim = forecast_steps * observable_dim          # 16

    key = jax.random.PRNGKey(0)
    kx, kt, kp = jax.random.split(key, 3)

    x = jax.random.normal(kx, (observable_steps, batch, observable_dim), jnp.float32)
    t_obs = jax.random.normal(kt, (observable_steps, batch, 1), jnp.float32)
    params = init_params(kp, input_dim, hidden_dim, output_dim)

    # f32-operand path (exact vs. reference on all TPU generations).
    out = mlp_forecaster_forward(x, t_obs, params, forecast_steps)
    out = jax.block_until_ready(out)

    assert out.shape == (forecast_steps, batch, observable_dim), out.shape
    assert out.dtype == jnp.float32

    ref = jax.block_until_ready(_reference_forward(x, t_obs, params, forecast_steps))
    assert jnp.allclose(out, ref, rtol=1e-4, atol=1e-4), float(jnp.max(jnp.abs(out - ref)))

    # bf16 MXU-operand path (recommended default on v6e/v7x); f32 accumulate kept,
    # so only operand rounding differs -> loose tolerance.
    out_bf16 = jax.block_until_ready(
        mlp_forecaster_forward(x, t_obs, params, forecast_steps,
                               matmul_dtype=jnp.bfloat16))
    assert out_bf16.shape == (forecast_steps, batch, observable_dim)
    assert jnp.allclose(out_bf16, ref, rtol=5e-2, atol=5e-2), \
        float(jnp.max(jnp.abs(out_bf16 - ref)))

    print("KERNEL_OK")
</pallas_src>

<mosaic_0001>
module attributes {stable_mosaic.version = 11 : i64} {
  func.func @mlp_forecaster_kernel(%arg0: i32, %arg1: memref<2x128xf32, #tpu.memory_space<vmem>>, %arg2: memref<128x32xf32, #tpu.memory_space<vmem>>, %arg3: memref<32x16xf32, #tpu.memory_space<vmem>>, %arg4: memref<3x32xf32, #tpu.memory_space<vmem>>, %arg5: memref<3x16xf32, #tpu.memory_space<vmem>>, %arg6: memref<2x16xf32, #tpu.memory_space<vmem>>) attributes {dimension_semantics = [#tpu.dimension_semantics<parallel>], iteration_bounds = array<i64: 1>, scalar_prefetch = 0 : i64, scratch_operands = 0 : i64, tpu.core_type = #tpu.core_type<tc>, window_params = [{transform_indices = @transform_0, window_bounds = array<i64: 2, 128>}, {pipeline_mode = #tpu.pipeline_mode<synchronous>, transform_indices = @transform_1, window_bounds = array<i64: 128, 32>}, {pipeline_mode = #tpu.pipeline_mode<synchronous>, transform_indices = @transform_2, window_bounds = array<i64: 32, 16>}, {pipeline_mode = #tpu.pipeline_mode<synchronous>, transform_indices = @transform_3, window_bounds = array<i64: 3, 32>}, {pipeline_mode = #tpu.pipeline_mode<synchronous>, transform_indices = @transform_4, window_bounds = array<i64: 3, 16>}, {transform_indices = @transform_5, window_bounds = array<i64: 2, 16>}]} {
    %c0 = arith.constant 0 : index
    %c0_0 = arith.constant 0 : index
    %0 = vector.load %arg1[%c0, %c0_0] : memref<2x128xf32, #tpu.memory_space<vmem>>, vector<2x128xf32>
    %c0_1 = arith.constant 0 : index
    %c0_2 = arith.constant 0 : index
    %1 = vector.load %arg4[%c0_1, %c0_2] : memref<3x32xf32, #tpu.memory_space<vmem>>, vector<1x32xf32>
    %c1 = arith.constant 1 : index
    %c0_3 = arith.constant 0 : index
    %2 = vector.load %arg4[%c1, %c0_3] : memref<3x32xf32, #tpu.memory_space<vmem>>, vector<1x32xf32>
    %c2 = arith.constant 2 : index
    %c0_4 = arith.constant 0 : index
    %3 = vector.load %arg4[%c2, %c0_4] : memref<3x32xf32, #tpu.memory_space<vmem>>, vector<1x32xf32>
    %c0_5 = arith.constant 0 : index
    %c0_6 = arith.constant 0 : index
    %4 = vector.load %arg5[%c0_5, %c0_6] : memref<3x16xf32, #tpu.memory_space<vmem>>, vector<1x16xf32>
    %c1_7 = arith.constant 1 : index
    %c0_8 = arith.constant 0 : index
    %5 = vector.load %arg5[%c1_7, %c0_8] : memref<3x16xf32, #tpu.memory_space<vmem>>, vector<1x16xf32>
    %c2_9 = arith.constant 2 : index
    %c0_10 = arith.constant 0 : index
    %6 = vector.load %arg5[%c2_9, %c0_10] : memref<3x16xf32, #tpu.memory_space<vmem>>, vector<1x16xf32>
    %c0_11 = arith.constant 0 : index
    %c0_12 = arith.constant 0 : index
    %7 = vector.load %arg2[%c0_11, %c0_12] : memref<128x32xf32, #tpu.memory_space<vmem>>, vector<128x32xf32>
    %cst = arith.constant dense<0.000000e+00> : vector<2x32xf32>
    %8 = tpu.matmul %0, %7, %cst {dimension_numbers = #tpu.dot_dimension_numbers<[1], [0], [0], [1], [0, 0, 1, 1], [], []>} : vector<2x128xf32>, vector<128x32xf32>, vector<2x32xf32> -> vector<2x32xf32>
    %9 = vector.broadcast %1 : vector<1x32xf32> to vector<2x32xf32>
    %10 = arith.addf %8, %9 : vector<2x32xf32>
    %cst_13 = arith.constant dense<0.000000e+00> : vector<2xf32>
    %11 = vector.multi_reduction <add>, %10, %cst_13 [1] : vector<2x32xf32> to vector<2xf32>
    %12 = vector.shape_cast %11 : vector<2xf32> to vector<2x1xf32>
    %cst_14 = arith.constant 3.200000e+01 : f32
    %13 = vector.broadcast %cst_14 : f32 to vector<2x1xf32>
    %14 = arith.divf %12, %13 : vector<2x1xf32>
    %15 = vector.broadcast %14 : vector<2x1xf32> to vector<2x32xf32>
    %16 = arith.subf %10, %15 : vector<2x32xf32>
    %17 = arith.mulf %16, %16 : vector<2x32xf32>
    %cst_15 = arith.constant dense<0.000000e+00> : vector<2xf32>
    %18 = vector.multi_reduction <add>, %17, %cst_15 [1] : vector<2x32xf32> to vector<2xf32>
    %19 = vector.shape_cast %18 : vector<2xf32> to vector<2x1xf32>
    %cst_16 = arith.constant 3.200000e+01 : f32
    %20 = vector.broadcast %cst_16 : f32 to vector<2x1xf32>
    %21 = arith.divf %19, %20 : vector<2x1xf32>
    %cst_17 = arith.constant 9.99999974E-6 : f32
    %22 = vector.broadcast %cst_17 : f32 to vector<2x1xf32>
    %23 = arith.addf %21, %22 : vector<2x1xf32>
    %24 = math.rsqrt %23 : vector<2x1xf32>
    %25 = vector.broadcast %24 : vector<2x1xf32> to vector<2x32xf32>
    %26 = arith.mulf %16, %25 : vector<2x32xf32>
    %27 = vector.broadcast %2 : vector<1x32xf32> to vector<2x32xf32>
    %28 = arith.mulf %26, %27 : vector<2x32xf32>
    %29 = vector.broadcast %3 : vector<1x32xf32> to vector<2x32xf32>
    %30 = arith.addf %28, %29 : vector<2x32xf32>
    %cst_18 = arith.constant 0.000000e+00 : f32
    %31 = vector.broadcast %cst_18 : f32 to vector<2x32xf32>
    %32 = arith.cmpf oge, %30, %31 : vector<2x32xf32>
    %cst_19 = arith.constant 0.00999999977 : f32
    %33 = vector.broadcast %cst_19 : f32 to vector<2x32xf32>
    %34 = arith.mulf %33, %30 : vector<2x32xf32>
    %35 = arith.select %32, %30, %34 : vector<2x32xi1>, vector<2x32xf32>
    %c0_20 = arith.constant 0 : index
    %c0_21 = arith.constant 0 : index
    %36 = vector.load %arg3[%c0_20, %c0_21] : memref<32x16xf32, #tpu.memory_space<vmem>>, vector<32x16xf32>
    %cst_22 = arith.constant dense<0.000000e+00> : vector<2x16xf32>
    %37 = tpu.matmul %35, %36, %cst_22 {dimension_numbers = #tpu.dot_dimension_numbers<[1], [0], [0], [1], [0, 0, 1, 1], [], []>} : vector<2x32xf32>, vector<32x16xf32>, vector<2x16xf32> -> vector<2x16xf32>
    %38 = vector.broadcast %4 : vector<1x16xf32> to vector<2x16xf32>
    %39 = arith.addf %37, %38 : vector<2x16xf32>
    %cst_23 = arith.constant dense<0.000000e+00> : vector<2xf32>
    %40 = vector.multi_reduction <add>, %39, %cst_23 [1] : vector<2x16xf32> to vector<2xf32>
    %41 = vector.shape_cast %40 : vector<2xf32> to vector<2x1xf32>
    %cst_24 = arith.constant 1.600000e+01 : f32
    %42 = vector.broadcast %cst_24 : f32 to vector<2x1xf32>
    %43 = arith.divf %41, %42 : vector<2x1xf32>
    %44 = vector.broadcast %43 : vector<2x1xf32> to vector<2x16xf32>
    %45 = arith.subf %39, %44 : vector<2x16xf32>
    %46 = arith.mulf %45, %45 : vector<2x16xf32>
    %cst_25 = arith.constant dense<0.000000e+00> : vector<2xf32>
    %47 = vector.multi_reduction <add>, %46, %cst_25 [1] : vector<2x16xf32> to vector<2xf32>
    %48 = vector.shape_cast %47 : vector<2xf32> to vector<2x1xf32>
    %cst_26 = arith.constant 1.600000e+01 : f32
    %49 = vector.broadcast %cst_26 : f32 to vector<2x1xf32>
    %50 = arith.divf %48, %49 : vector<2x1xf32>
    %cst_27 = arith.constant 9.99999974E-6 : f32
    %51 = vector.broadcast %cst_27 : f32 to vector<2x1xf32>
    %52 = arith.addf %50, %51 : vector<2x1xf32>
    %53 = math.rsqrt %52 : vector<2x1xf32>
    %54 = vector.broadcast %53 : vector<2x1xf32> to vector<2x16xf32>
    %55 = arith.mulf %45, %54 : vector<2x16xf32>
    %56 = vector.broadcast %5 : vector<1x16xf32> to vector<2x16xf32>
    %57 = arith.mulf %55, %56 : vector<2x16xf32>
    %58 = vector.broadcast %6 : vector<1x16xf32> to vector<2x16xf32>
    %59 = arith.addf %57, %58 : vector<2x16xf32>
    %cst_28 = arith.constant 0.000000e+00 : f32
    %60 = vector.broadcast %cst_28 : f32 to vector<2x16xf32>
    %61 = arith.cmpf oge, %59, %60 : vector<2x16xf32>
    %cst_29 = arith.constant 0.00999999977 : f32
    %62 = vector.broadcast %cst_29 : f32 to vector<2x16xf32>
    %63 = arith.mulf %62, %59 : vector<2x16xf32>
    %64 = arith.select %61, %59, %63 : vector<2x16xi1>, vector<2x16xf32>
    %c0_30 = arith.constant 0 : index
    %c0_31 = arith.constant 0 : index
    %65 = vector.load %arg6[%c0_30, %c0_31] : memref<2x16xf32, #tpu.memory_space<vmem>>, vector<2x16xf32>
    tpu.vector_store %arg6[%c0_30, %c0_31], %64 {strides = array<i32>} : memref<2x16xf32, #tpu.memory_space<vmem>>, vector<2x16xf32>,
    return
  }
  func.func @transform_0(%arg0: i32) -> (i32, i32) {
    %c0_i32 = arith.constant 0 : i32
    %c0_i32_0 = arith.constant 0 : i32
    return %arg0, %c0_i32 : i32, i32
  }
  func.func @transform_1(%arg0: i32) -> (i32, i32) {
    %c0_i32 = arith.constant 0 : i32
    %c0_i32_0 = arith.constant 0 : i32
    %c0_i32_1 = arith.constant 0 : i32
    return %c0_i32, %c0_i32_0 : i32, i32
  }
  func.func @transform_2(%arg0: i32) -> (i32, i32) {
    %c0_i32 = arith.constant 0 : i32
    %c0_i32_0 = arith.constant 0 : i32
    %c0_i32_1 = arith.constant 0 : i32
    return %c0_i32, %c0_i32_0 : i32, i32
  }
  func.func @transform_3(%arg0: i32) -> (i32, i32) {
    %c0_i32 = arith.constant 0 : i32
    %c0_i32_0 = arith.constant 0 : i32
    %c0_i32_1 = arith.constant 0 : i32
    return %c0_i32, %c0_i32_0 : i32, i32
  }
  func.func @transform_4(%arg0: i32) -> (i32, i32) {
    %c0_i32 = arith.constant 0 : i32
    %c0_i32_0 = arith.constant 0 : i32
    %c0_i32_1 = arith.constant 0 : i32
    return %c0_i32, %c0_i32_0 : i32, i32
  }
  func.func @transform_5(%arg0: i32) -> (i32, i32) {
    %c0_i32 = arith.constant 0 : i32
    %c0_i32_0 = arith.constant 0 : i32
    return %arg0, %c0_i32 : i32, i32
  }
}

</mosaic_0001>

<llo_original>
// kernel: tpu_custom_call.1
$region0: #{tpu_custom_call.1}
  #allocation0 [shape = 'u32[]', space=smem, size = 0x4, offset = 0x4, fixed_abs, tag = 'smem constant byte address 0x4 - core index']
  #allocation1 [shape = 'u32[144,128]{1,0:T(1,128)}', space=vmem, size = 0x12000, scoped, tag = 'internal scratch']
  %s0 = inlined_call_operand.vmem [shape: f32[2,128], index: 0, kind: input, shape index: {}]
  %s1 = inlined_call_operand.vmem [shape: f32[128,32], index: 1, kind: input, shape index: {}]
  %s2 = inlined_call_operand.vmem [shape: f32[32,16], index: 2, kind: input, shape index: {}]
  %s3 = inlined_call_operand.vmem [shape: f32[3,32], index: 3, kind: input, shape index: {}]
  %s4 = inlined_call_operand.vmem [shape: f32[3,16], index: 4, kind: input, shape index: {}]
  %s5 = inlined_call_operand.hbm [shape: f32[2,16], index: 5, kind: output, shape index: {}]
  %s6 = sld [smem:[#allocation0]]
  $region30: #{tpu_custom_call.1} parent=0
    _
  %s8 = ssub.s32 1, %s6
  %s9 = scalar_select 0, %s8, %s6
  $region1: #{tpu_custom_call.1} parent=0
    #allocation2 [shape = 'u8[1024]{0}', space=vmem, size = 0x400, scoped, tag = 'output window, operand 0, single buffered']
    #allocation3 [shape = 's32[1]{0}', space=sflag, size = 0x4, scoped, tag = 'scoped memory for tpu_custom_call.1']
    %10 = vsyncpa [#allocation3], 0
    // Predicated region
    $region2: #{tpu_custom_call.1} parent=1 // pred_check
      _
    $region3: #{tpu_custom_call.1} parent=1 // pred_check_branch
      %12 = sbr.rel (0) target = $region5
    $region4: #{tpu_custom_call.1} parent=1 // pred_region
      _
    $region5: #{tpu_custom_call.1} parent=1 // pred_fallthru
      _
    // Predicated region
    $region6: #{tpu_custom_call.1} parent=1 // pred_check
      _
    $region7: #{tpu_custom_call.1} parent=1 // pred_check_branch
      %14 = sbr.rel (0) target = $region9
    $region8: #{tpu_custom_call.1} parent=1 // pred_region
      _
    $region9: #{tpu_custom_call.1} parent=1 // pred_fallthru
      _
    // Predicated region
    $region10: #{tpu_custom_call.1} parent=1 // pred_check
      _
    $region11: #{tpu_custom_call.1} parent=1 // pred_check_branch
      %16 = sbr.rel (0) target = $region13
    $region12: #{tpu_custom_call.1} parent=1 // pred_region
      _
    $region13: #{tpu_custom_call.1} parent=1 // pred_fallthru
      _
    // Predicated region
    $region14: #{tpu_custom_call.1} parent=1 // pred_check
      _
    $region15: #{tpu_custom_call.1} parent=1 // pred_check_branch
      %18 = sbr.rel (0) target = $region17
    $region16: #{tpu_custom_call.1} parent=1 // pred_region
      _
    $region17: #{tpu_custom_call.1} parent=1 // pred_fallthru
      _
    // Predicated region
    $region18: #{tpu_custom_call.1} parent=1 // pred_check
      _
    $region19: #{tpu_custom_call.1} parent=1 // pred_check_branch
      %20 = sbr.rel (0) target = $region21
    $region20: #{tpu_custom_call.1} parent=1 // pred_region
      _
    $region21: #{tpu_custom_call.1} parent=1 // pred_fallthru
      _
    %v21 = vld [vmem:[%s0] sm:$0x3]
    %v22 = vld [vmem:[%s3] sm:$0x1]
    %v23 = vld [vmem:[%s3 + $0x1] sm:$0x1]
    %v24 = vld [vmem:[%s3 + $0x2] sm:$0x1]
    %v25 = vld [vmem:[%s4] sm:$0x1]
    %v26 = vld [vmem:[%s4 + $0x1] sm:$0x1]
    %v27 = vld [vmem:[%s4 + $0x2] sm:$0x1]
    %v28 = vld [vmem:[%s1] sm:$0xff]
    %v29 = vld [vmem:[%s1 + $0x8] sm:$0xff]
    %v30 = vld [vmem:[%s1 + $0x10] sm:$0xff]
    %v31 = vld [vmem:[%s1 + $0x18] sm:$0xff]
    %v32 = vld [vmem:[%s1 + $0x20] sm:$0xff]
    %v33 = vld [vmem:[%s1 + $0x28] sm:$0xff]
    %v34 = vld [vmem:[%s1 + $0x30] sm:$0xff]
    %v35 = vld [vmem:[%s1 + $0x38] sm:$0xff]
    %v36 = vld [vmem:[%s1 + $0x40] sm:$0xff]
    %v37 = vld [vmem:[%s1 + $0x48] sm:$0xff]
    %v38 = vld [vmem:[%s1 + $0x50] sm:$0xff]
    %v39 = vld [vmem:[%s1 + $0x58] sm:$0xff]
    %v40 = vld [vmem:[%s1 + $0x60] sm:$0xff]
    %v41 = vld [vmem:[%s1 + $0x68] sm:$0xff]
    %v42 = vld [vmem:[%s1 + $0x70] sm:$0xff]
    %v43 = vld [vmem:[%s1 + $0x78] sm:$0xff]
    %v44 = vlaneseq
    %v45 = vshrl.u32 %v44, 7
    %v46 = vsub.s32 0, %v45
    %v47 = vrot.slane %v22, %v46
    %48 = vmatprep.subr.mxu0 0.0
    %49 = vmatpush1.msra.mxu0 %v43
    %50 = vmatprep.subr.mxu0 0.0
    %51 = vmatpush1.msra.mxu0 %v42
    %52 = vmatprep.subr.mxu0 0.0
    %53 = vmatpush1.msra.mxu0 %v41
    %54 = vmatprep.subr.mxu0 0.0
    %55 = vmatpush1.msra.mxu0 %v40
    %56 = vmatprep.subr.mxu0 0.0
    %57 = vmatpush1.msra.mxu0 %v39
    %58 = vmatprep.subr.mxu0 0.0
    %59 = vmatpush1.msra.mxu0 %v38
    %60 = vmatprep.subr.mxu0 0.0
    %61 = vmatpush1.msra.mxu0 %v37
    %62 = vmatprep.subr.mxu0 0.0
    %63 = vmatpush1.msra.mxu0 %v36
    %64 = vmatprep.subr.mxu0 0.0
    %65 = vmatpush1.msra.mxu0 %v35
    %66 = vmatprep.subr.mxu0 0.0
    %67 = vmatpush1.msra.mxu0 %v34
    %68 = vmatprep.subr.mxu0 0.0
    %69 = vmatpush1.msra.mxu0 %v33
    %70 = vmatprep.subr.mxu0 0.0
    %71 = vmatpush1.msra.mxu0 %v32
    %72 = vmatprep.subr.mxu0 0.0
    %73 = vmatpush1.msra.mxu0 %v31
    %74 = vmatprep.subr.mxu0 0.0
    %75 = vmatpush1.msra.mxu0 %v30
    %76 = vmatprep.subr.mxu0 0.0
    %77 = vmatpush1.msra.mxu0 %v29
    %78 = vmatprep.subr.mxu0 0.0
    %79 = vmatpush1.msra.mxu0 %v28
    %80 = vmatprep.subr.mxu0 0.0
    %81 = vmatpush2.msra.mxu0 0.0
    %82 = vmatprep.subr.mxu0 0.0
    %83 = vmatpush2.msra.mxu0 0.0
    %84 = vmatprep.subr.mxu0 0.0
    %85 = vmatpush2.msra.mxu0 0.0
    %86 = vmatprep.subr.mxu0 0.0
    %87 = vmatpush2.msra.mxu0 0.0
    %88 = vmatprep.subr.mxu0 0.0
    %89 = vmatpush2.msra.mxu0 0.0
    %90 = vmatprep.subr.mxu0 0.0
    %91 = vmatpush2.msra.mxu0 0.0
    %92 = vmatprep.subr.mxu0 0.0
    %93 = vmatpush2.msra.mxu0 0.0
    %94 = vmatprep.subr.mxu0 0.0
    %95 = vmatpush2.msra.mxu0 0.0
    %96 = vmatprep.subr.mxu0 0.0
    %97 = vmatpush2.msra.mxu0 0.0
    %98 = vmatprep.subr.mxu0 0.0
    %99 = vmatpush2.msra.mxu0 0.0
    %100 = vmatprep.subr.mxu0 0.0
    %101 = vmatpush2.msra.mxu0 0.0
    %102 = vmatprep.subr.mxu0 0.0
    %103 = vmatpush2.msra.mxu0 0.0
    %104 = vmatprep.subr.mxu0 0.0
    %105 = vmatpush2.msra.mxu0 0.0
    %106 = vmatprep.subr.mxu0 0.0
    %107 = vmatpush2.msra.mxu0 0.0
    %108 = vmatprep.subr.mxu0 0.0
    %109 = vmatpush2.msra.mxu0 0.0
    %110 = vmatprep.subr.mxu0 0.0
    %111 = vmatpush2.msra.mxu0 0.0
    %112 = vmatprep.mubr.f32.mxu0 0.0
    %113 = vmatmul.mubr.f32.gmra.mxu0 %v21
    %v114 = vpop.f32.mrf.mxu0
    %v115 = vadd.f32 %v47, %v114
    %v116 = vpop.f32.mrf.mxu0
    %117 = vdwg.mxu0
    %vm118 = vcmask 254976
    %v119 = vsel %vm118, %v115, 0.0
    %120 = vadd.xlane.f32.xlu0 %v119
    %v121 = vpop.xlane.xlu0 %120
    %v122 = vrcp.pop 32.0
    %v123 = vmul.f32 %v121, %v122
    %v124 = vsub.f32 %v115, %v123
    %v125 = vmul.f32 %v124, %v124
    %v126 = vsel %vm118, %v125, 0.0
    %127 = vadd.xlane.f32.xlu0 %v126
    %v128 = vpop.xlane.xlu0 %127
    %v129 = vmul.f32 %v128, %v122
    %v130 = vadd.f32 %v129, 1e-05
    %v131 = vrsqrt.pop %v130
    %v132 = vmul.f32 %v124, %v131
    %v133 = vlaneseq
    %v134 = vshrl.u32 %v133, 7
    %v135 = vsub.s32 0, %v134
    %v136 = vrot.slane %v23, %v135
    %v137 = vmul.f32 %v132, %v136
    %v138 = vlaneseq
    %v139 = vshrl.u32 %v138, 7
    %v140 = vsub.s32 0, %v139
    %v141 = vrot.slane %v24, %v140
    %v142 = vadd.f32 %v137, %v141
    %vm143 = vcmp.ge.f32.partialorder %v142, 0.0
    %v144 = vmul.f32 %v142, 0.01
    %v145 = vsel %vm143, %v142, %v144
    %v146 = vld [vmem:[%s2] sm:$0xff]
    %v147 = vld [vmem:[%s2 + $0x8] sm:$0xff]
    %v148 = vld [vmem:[%s2 + $0x10] sm:$0xff]
    %v149 = vld [vmem:[%s2 + $0x18] sm:$0xff]
    %v150 = vlaneseq
    %v151 = vshrl.u32 %v150, 7
    %v152 = vsub.s32 0, %v151
    %v153 = vrot.slane %v25, %v152
    %vm154 = vcmask 261120
    %v156 = vsel %vm154, %v145, 0
    %158 = vmatprep.subr.mxu0 0.0
    %159 = vmatpush1.msra.mxu0 0.0
    %160 = vmatprep.subr.mxu0 0.0
    %161 = vmatpush1.msra.mxu0 0.0
    %162 = vmatprep.subr.mxu0 0.0
    %163 = vmatpush1.msra.mxu0 0.0
    %164 = vmatprep.subr.mxu0 0.0
    %165 = vmatpush1.msra.mxu0 0.0
    %166 = vmatprep.subr.mxu0 0.0
    %167 = vmatpush1.msra.mxu0 0.0
    %168 = vmatprep.subr.mxu0 0.0
    %169 = vmatpush1.msra.mxu0 0.0
    %170 = vmatprep.subr.mxu0 0.0
    %171 = vmatpush1.msra.mxu0 0.0
    %172 = vmatprep.subr.mxu0 0.0
    %173 = vmatpush1.msra.mxu0 0.0
    %174 = vmatprep.subr.mxu0 0.0
    %175 = vmatpush1.msra.mxu0 0.0
    %176 = vmatprep.subr.mxu0 0.0
    %177 = vmatpush1.msra.mxu0 0.0
    %178 = vmatprep.subr.mxu0 0.0
    %179 = vmatpush1.msra.mxu0 0.0
    %180 = vmatprep.subr.mxu0 0.0
    %181 = vmatpush1.msra.mxu0 0.0
    %182 = vmatprep.subr.mxu0 0.0
    %183 = vmatpush1.msra.mxu0 %v149
    %184 = vmatprep.subr.mxu0 0.0
    %185 = vmatpush1.msra.mxu0 %v148
    %186 = vmatprep.subr.mxu0 0.0
    %187 = vmatpush1.msra.mxu0 %v147
    %188 = vmatprep.subr.mxu0 0.0
    %189 = vmatpush1.msra.mxu0 %v146
    %190 = vmatprep.subr.mxu0 0.0
    %191 = vmatpush2.msra.mxu0 0.0
    %192 = vmatprep.subr.mxu0 0.0
    %193 = vmatpush2.msra.mxu0 0.0
    %194 = vmatprep.subr.mxu0 0.0
    %195 = vmatpush2.msra.mxu0 0.0
    %196 = vmatprep.subr.mxu0 0.0
    %197 = vmatpush2.msra.mxu0 0.0
    %198 = vmatprep.subr.mxu0 0.0
    %199 = vmatpush2.msra.mxu0 0.0
    %200 = vmatprep.subr.mxu0 0.0
    %201 = vmatpush2.msra.mxu0 0.0
    %202 = vmatprep.subr.mxu0 0.0
    %203 = vmatpush2.msra.mxu0 0.0
    %204 = vmatprep.subr.mxu0 0.0
    %205 = vmatpush2.msra.mxu0 0.0
    %206 = vmatprep.subr.mxu0 0.0
    %207 = vmatpush2.msra.mxu0 0.0
    %208 = vmatprep.subr.mxu0 0.0
    %209 = vmatpush2.msra.mxu0 0.0
    %210 = vmatprep.subr.mxu0 0.0
    %211 = vmatpush2.msra.mxu0 0.0
    %212 = vmatprep.subr.mxu0 0.0
    %213 = vmatpush2.msra.mxu0 0.0
    %214 = vmatprep.subr.mxu0 0.0
    %215 = vmatpush2.msra.mxu0 0.0
    %216 = vmatprep.subr.mxu0 0.0
    %217 = vmatpush2.msra.mxu0 0.0
    %218 = vmatprep.subr.mxu0 0.0
    %219 = vmatpush2.msra.mxu0 0.0
    %220 = vmatprep.subr.mxu0 0.0
    %221 = vmatpush2.msra.mxu0 0.0
    %222 = vmatprep.mubr.f32.mxu0 0.0
    %223 = vmatmul.mubr.f32.gmra.mxu0 %v156
    %v224 = vpop.f32.mrf.mxu0
    %v225 = vadd.f32 %v153, %v224
    %v226 = vpop.f32.mrf.mxu0
    %227 = vdwg.mxu0
    %vm228 = vcmask 123904
    %v229 = vsel %vm228, %v225, 0.0
    %230 = vadd.xlane.f32.xlu0 %v229
    %v231 = vpop.xlane.xlu0 %230
    %v232 = vrcp.pop 16.0
    %v233 = vmul.f32 %v231, %v232
    %v234 = vsub.f32 %v225, %v233
    %v235 = vmul.f32 %v234, %v234
    %v236 = vsel %vm228, %v235, 0.0
    %237 = vadd.xlane.f32.xlu0 %v236
    %v238 = vpop.xlane.xlu0 %237
    %v239 = vmul.f32 %v238, %v232
    %v240 = vadd.f32 %v239, 1e-05
    %v241 = vrsqrt.pop %v240
    %v242 = vmul.f32 %v234, %v241
    %v243 = vlaneseq
    %v244 = vshrl.u32 %v243, 7
    %v245 = vsub.s32 0, %v244
    %v246 = vrot.slane %v26, %v245
    %v247 = vmul.f32 %v242, %v246
    %v248 = vlaneseq
    %v249 = vshrl.u32 %v248, 7
    %v250 = vsub.s32 0, %v249
    %v251 = vrot.slane %v27, %v250
    %v252 = vadd.f32 %v247, %v251
    %vm253 = vcmp.ge.f32.partialorder %v252, 0.0
    %v254 = vmul.f32 %v252, 0.01
    %v255 = vsel %vm253, %v252, %v254
    %256 = vst.msk [vmem:[#allocation2] sm:$0x3] %vm228, %v255
    // Predicated region
    $region22: #{tpu_custom_call.1} parent=1 // pred_check
      _
    $region23: #{tpu_custom_call.1} parent=1 // pred_check_branch
      %258 = sbr.rel (0) target = $region25
    $region24: #{tpu_custom_call.1} parent=1 // pred_region
      %s260 = ssub.s32 32, 32
      %261 = vsyncadd [#allocation3], %s260
      %s263 = sshll.u32 [#allocation2], 4
      %s264 = int_to_ptr.vmem [resolvable:$true] %s263
      %266 = dma.vmem_to_hbm [thread:$0]  %s264, 32, %s5, [#allocation3]
    $region25: #{tpu_custom_call.1} parent=1 // pred_fallthru
      _
    // Predicated region
    $region26: #{tpu_custom_call.1} parent=1 // pred_check
      _
    $region27: #{tpu_custom_call.1} parent=1 // pred_check_branch
      %268 = sbr.rel (0) target = $region29
    $region28: #{tpu_custom_call.1} parent=1 // pred_region
      %269 = dma.done [#allocation3], 32
    $region29: #{tpu_custom_call.1} parent=1 // pred_fallthru
      _
    %270 = vsyncpa [#allocation3], 1

</llo_original>
